<compile_context>
chip_gen: v7x
topology: tpu7x:2x2x1
jax: 0.10.0
libtpu: 0.0.40
codegen_flags: <defaults>
</compile_context>

<pallas_src>
import jax
import jax.numpy as jnp
from jax import lax
from jax.experimental import pallas as pl
from jax.experimental.pallas import tpu as pltpu

HBAR = 197.3269804   # hbar*c [MeV fm]; only used by the V assembly (unused in forward)
N_MESH = 64          # N in the module (momentum mesh for vNN / V)
N_KNOTS = 64         # number of rows in the filename2 wavefunction table (synthetic)
LANE = 128           # TPU lane width


# ----------------------------- Pallas kernel ---------------------------------
def _interp_kernel(x_ref, tab_ref, out_ref):
    """Per tile: TM query momenta (lanes) vs K knots (sublanes).

    tab_ref columns: [ksd, a_s, b_s, a_d, b_d, 0, 0, 0] where for segment i
    (between knots i and i+1): b = (y[i+1]-y[i])/(k[i+1]-k[i]), a = y[i] - b*k[i].
    """
    x = x_ref[...]                       # (1, TM)  queries on lanes
    tab = tab_ref[...]                   # (K, 8)   packed knot-side tables
    kn = tab[:, 0:1]                     # (K, 1)
    a_s = tab[:, 1:2]
    b_s = tab[:, 2:3]
    a_d = tab[:, 3:4]
    b_d = tab[:, 4:5]
    K = kn.shape[0]

    # scipy interp1d(kind='linear', fill_value='extrapolate'):
    #   idx = clip(searchsorted(kn, x, side='left'), 1, K-1); lo = idx - 1
    cnt = jnp.sum((kn < x).astype(jnp.int32), axis=0, keepdims=True)   # (1, TM)
    lo = jnp.clip(cnt, 1, K - 1) - 1                                   # (1, TM) in [0, K-2]

    # Gather-free gather: one one-hot over the sublane (knot) axis, 4 masked sums.
    seg = lax.broadcasted_iota(jnp.int32, (K, 1), 0)                   # (K, 1)
    sel = (seg == lo).astype(x.dtype)                                  # (K, TM)

    a_s_q = jnp.sum(sel * a_s, axis=0, keepdims=True)                  # (1, TM)
    b_s_q = jnp.sum(sel * b_s, axis=0, keepdims=True)
    a_d_q = jnp.sum(sel * a_d, axis=0, keepdims=True)
    b_d_q = jnp.sum(sel * b_d, axis=0, keepdims=True)

    # Pure mul/add on the VPU; lane-dense (2, TM) output slab.
    out_ref[0:1, :] = a_s_q + b_s_q * x
    out_ref[1:2, :] = a_d_q + b_d_q * x


# ------------------------------- Wrapper --------------------------------------
def n3lo_forward(input_range, ksd, wfs, wfd, *, tm_max=512):
    dtype = ksd.dtype
    x = input_range.reshape(-1).astype(dtype)      # .flatten() in the reference
    M = x.shape[0]
    K = ksd.shape[0]

    # ---- Precompute per-segment line coefficients (removes in-kernel divide) ----
    dk = ksd[1:] - ksd[:-1]
    b_s = (wfs[1:] - wfs[:-1]) / dk                 # (K-1,)
    b_d = (wfd[1:] - wfd[:-1]) / dk
    a_s = wfs[:-1] - b_s * ksd[:-1]
    a_d = wfd[:-1] - b_d * ksd[:-1]
    # pad to K entries (index K-1 is never selected: lo <= K-2)
    pad1 = lambda v: jnp.concatenate([v, v[-1:]])
    zeros_k = jnp.zeros((K,), dtype)
    tab = jnp.stack(
        [ksd, pad1(a_s), pad1(b_s), pad1(a_d), pad1(b_d), zeros_k, zeros_k, zeros_k],
        axis=1,
    ).astype(dtype)                                 # (K, 8) packed knot-side table

    # ---- Tiling: 128-aligned lane tiles, >=2 grid steps when possible ----------
    nblk = pl.cdiv(M, LANE)                         # number of 128-wide lane blocks
    half = -(-nblk // 2) if nblk >= 2 else 1        # ceil(nblk / 2)
    blk_per_tile = max(1, min(tm_max // LANE, half))
    tm = blk_per_tile * LANE
    grid_m = pl.cdiv(M, tm)
    m_pad = grid_m * tm

    x_pad = jnp.pad(x, (0, m_pad - M))              # padded tail results are discarded
    x2 = x_pad.reshape(1, m_pad)                    # queries on the lane axis

    grid_spec = pltpu.PrefetchScalarGridSpec(
        num_scalar_prefetch=0,
        grid=(grid_m,),
        in_specs=[
            pl.BlockSpec((1, tm), lambda i: (0, i)),    # queries, tiled over lanes
            pl.BlockSpec((K, 8), lambda i: (0, 0)),     # packed tables, resident (<2 KiB)
        ],
        out_specs=pl.BlockSpec((2, tm), lambda i: (0, i)),   # [wfs_interp; wfd_interp]
    )
    out = pl.pallas_call(
        _interp_kernel,
        out_shape=jax.ShapeDtypeStruct((2, m_pad), dtype),
        grid_spec=grid_spec,
        compiler_params=pltpu.CompilerParams(dimension_semantics=("parallel",)),
    )(x2, tab)

    gs_k = x.reshape(M, 1)                          # pass-through, no kernel output needed
    gs_wfs = out[0, :M].reshape(M, 1)
    gs_wfd = out[1, :M].reshape(M, 1)
    return gs_k, gs_wfs, gs_wfd


# -------------------- Deterministic synthetic parameter init ------------------
def init_n3lo_params(dtype=jnp.float32):
    # TODO(synk): np.genfromtxt(filename/filename2) file loads are replaced by
    # deterministic synthetic tables of the same shapes.
    key = jax.random.PRNGKey(0)
    N = N_MESH
    kk = jnp.linspace(0.01, 6.0, N, dtype=dtype)
    k_grid = jnp.tile(kk[:, None], (1, N))           # self.k
    kp_grid = jnp.tile(kk[None, :], (N, 1))          # self.kp
    ks = jax.random.split(key, 4)
    vNN_S = 1e-3 * jax.random.normal(ks[0], (N, N), dtype)
    vNN_D = 1e-3 * jax.random.normal(ks[1], (N, N), dtype)
    vNN_SD = 1e-4 * jax.random.normal(ks[2], (N, N), dtype)
    vNN_DS = 1e-4 * jax.random.normal(ks[3], (N, N), dtype)
    V = jnp.block([[vNN_S * HBAR ** 3, vNN_SD * HBAR ** 3],
                   [vNN_DS * HBAR ** 3, vNN_D * HBAR ** 3]])   # (2N, 2N); unused in forward

    # Deuteron-like wavefunction table (filename2 replacement)
    ksd = jnp.linspace(0.002, 8.0, N_KNOTS, dtype=dtype)
    wfs = jnp.exp(-0.6 * ksd) * jnp.cos(0.3 * ksd)
    wfd = 0.02 * ksd ** 2 * jnp.exp(-0.8 * ksd)
    return dict(k=k_grid, kp=kp_grid, vNN_S=vNN_S, vNN_D=vNN_D, vNN_SD=vNN_SD,
                vNN_DS=vNN_DS, V=V, ksd=ksd, wfs=wfs.astype(dtype), wfd=wfd.astype(dtype))


# ------------------------------- Reference ------------------------------------
def _interp_ref(xq, kn, yv):
    # scipy interp1d(kind='linear', fill_value='extrapolate') semantics
    idx = jnp.clip(jnp.searchsorted(kn, xq, side="left"), 1, kn.shape[0] - 1)
    lo = idx - 1
    x_lo, x_hi = kn[lo], kn[idx]
    y_lo, y_hi = yv[lo], yv[idx]
    return y_lo + (xq - x_lo) / (x_hi - x_lo) * (y_hi - y_lo)


if __name__ == "__main__":
    params = init_n3lo_params(jnp.float32)

    # Small example input: (2, 128) -> M = 256 flattened query momenta,
    # including points outside [ksd[0], ksd[-1]] to exercise extrapolation.
    input_range = jax.random.uniform(
        jax.random.PRNGKey(0), (2, 128), jnp.float32, minval=-0.5, maxval=9.0)

    gs_k, gs_wfs, gs_wfd = n3lo_forward(
        input_range, params["ksd"], params["wfs"], params["wfd"])
    jax.block_until_ready((gs_k, gs_wfs, gs_wfd))

    # Correctness check against plain-JAX reference of scipy semantics.
    xq = input_range.reshape(-1)
    ref_s = _interp_ref(xq, params["ksd"], params["wfs"])
    ref_d = _interp_ref(xq, params["ksd"], params["wfd"])
    assert gs_k.shape == (256, 1) and gs_wfs.shape == (256, 1) and gs_wfd.shape == (256, 1)
    assert jnp.allclose(gs_k[:, 0], xq, atol=1e-6)
    assert jnp.allclose(gs_wfs[:, 0], ref_s, atol=1e-5, rtol=1e-5)
    assert jnp.allclose(gs_wfd[:, 0], ref_d, atol=1e-5, rtol=1e-5)

    print("KERNEL_OK")
</pallas_src>

<mosaic_0001>
module attributes {stable_mosaic.version = 11 : i64} {
  func.func @_interp_kernel(%arg0: i32, %arg1: memref<1x128xf32, #tpu.memory_space<vmem>>, %arg2: memref<64x8xf32, #tpu.memory_space<vmem>>, %arg3: memref<2x128xf32, #tpu.memory_space<vmem>>) attributes {dimension_semantics = [#tpu.dimension_semantics<parallel>], iteration_bounds = array<i64: 2>, scalar_prefetch = 0 : i64, scratch_operands = 0 : i64, tpu.core_type = #tpu.core_type<tc>, window_params = [{transform_indices = @transform_0, window_bounds = array<i64: 1, 128>}, {pipeline_mode = #tpu.pipeline_mode<synchronous>, transform_indices = @transform_1, window_bounds = array<i64: 64, 8>}, {transform_indices = @transform_2, window_bounds = array<i64: 2, 128>}]} {
    %c0 = arith.constant 0 : index
    %c0_0 = arith.constant 0 : index
    %0 = vector.load %arg1[%c0, %c0_0] : memref<1x128xf32, #tpu.memory_space<vmem>>, vector<1x128xf32>
    %c0_1 = arith.constant 0 : index
    %c0_2 = arith.constant 0 : index
    %1 = vector.load %arg2[%c0_1, %c0_2] : memref<64x8xf32, #tpu.memory_space<vmem>>, vector<64x8xf32>
    %2 = vector.extract_strided_slice %1 {offsets = [0, 0], sizes = [64, 1], strides = [1, 1]} : vector<64x8xf32> to vector<64x1xf32>
    %3 = vector.extract_strided_slice %1 {offsets = [0, 1], sizes = [64, 1], strides = [1, 1]} : vector<64x8xf32> to vector<64x1xf32>
    %4 = vector.extract_strided_slice %1 {offsets = [0, 2], sizes = [64, 1], strides = [1, 1]} : vector<64x8xf32> to vector<64x1xf32>
    %5 = vector.extract_strided_slice %1 {offsets = [0, 3], sizes = [64, 1], strides = [1, 1]} : vector<64x8xf32> to vector<64x1xf32>
    %6 = vector.extract_strided_slice %1 {offsets = [0, 4], sizes = [64, 1], strides = [1, 1]} : vector<64x8xf32> to vector<64x1xf32>
    %7 = vector.broadcast %2 : vector<64x1xf32> to vector<64x128xf32>
    %8 = vector.broadcast %0 : vector<1x128xf32> to vector<64x128xf32>
    %9 = arith.cmpf olt, %7, %8 : vector<64x128xf32>
    %10 = arith.extui %9 : vector<64x128xi1> to vector<64x128xi32>
    %cst = arith.constant dense<0> : vector<128xi32>
    %11 = vector.multi_reduction <add>, %10, %cst [0] : vector<64x128xi32> to vector<128xi32>
    %12 = vector.shape_cast %11 : vector<128xi32> to vector<1x128xi32>
    %c1_i32 = arith.constant 1 : i32
    %c63_i32 = arith.constant 63 : i32
    %13 = vector.broadcast %c1_i32 : i32 to vector<1x128xi32>
    %14 = arith.maxsi %13, %12 : vector<1x128xi32>
    %15 = vector.broadcast %c63_i32 : i32 to vector<1x128xi32>
    %16 = arith.minsi %15, %14 : vector<1x128xi32>
    %c1_i32_3 = arith.constant 1 : i32
    %17 = vector.broadcast %c1_i32_3 : i32 to vector<1x128xi32>
    %18 = arith.subi %16, %17 : vector<1x128xi32>
    %19 = tpu.iota {dimensions = array<i32: 0>} : vector<64x1xi32>
    %20 = vector.broadcast %19 : vector<64x1xi32> to vector<64x128xi32>
    %21 = vector.broadcast %18 : vector<1x128xi32> to vector<64x128xi32>
    %22 = arith.cmpi eq, %20, %21 : vector<64x128xi32>
    %23 = arith.extui %22 : vector<64x128xi1> to vector<64x128xi32>
    %24 = arith.sitofp %23 : vector<64x128xi32> to vector<64x128xf32>
    %25 = vector.broadcast %3 : vector<64x1xf32> to vector<64x128xf32>
    %26 = arith.mulf %24, %25 : vector<64x128xf32>
    %cst_4 = arith.constant dense<0.000000e+00> : vector<128xf32>
    %27 = vector.multi_reduction <add>, %26, %cst_4 [0] : vector<64x128xf32> to vector<128xf32>
    %28 = vector.shape_cast %27 : vector<128xf32> to vector<1x128xf32>
    %29 = vector.broadcast %4 : vector<64x1xf32> to vector<64x128xf32>
    %30 = arith.mulf %24, %29 : vector<64x128xf32>
    %cst_5 = arith.constant dense<0.000000e+00> : vector<128xf32>
    %31 = vector.multi_reduction <add>, %30, %cst_5 [0] : vector<64x128xf32> to vector<128xf32>
    %32 = vector.shape_cast %31 : vector<128xf32> to vector<1x128xf32>
    %33 = vector.broadcast %5 : vector<64x1xf32> to vector<64x128xf32>
    %34 = arith.mulf %24, %33 : vector<64x128xf32>
    %cst_6 = arith.constant dense<0.000000e+00> : vector<128xf32>
    %35 = vector.multi_reduction <add>, %34, %cst_6 [0] : vector<64x128xf32> to vector<128xf32>
    %36 = vector.shape_cast %35 : vector<128xf32> to vector<1x128xf32>
    %37 = vector.broadcast %6 : vector<64x1xf32> to vector<64x128xf32>
    %38 = arith.mulf %24, %37 : vector<64x128xf32>
    %cst_7 = arith.constant dense<0.000000e+00> : vector<128xf32>
    %39 = vector.multi_reduction <add>, %38, %cst_7 [0] : vector<64x128xf32> to vector<128xf32>
    %40 = vector.shape_cast %39 : vector<128xf32> to vector<1x128xf32>
    %41 = arith.mulf %32, %0 : vector<1x128xf32>
    %42 = arith.addf %28, %41 : vector<1x128xf32>
    %c0_8 = arith.constant 0 : index
    %c0_9 = arith.constant 0 : index
    %43 = vector.load %arg3[%c0_8, %c0_9] : memref<2x128xf32, #tpu.memory_space<vmem>>, vector<1x128xf32>
    tpu.vector_store %arg3[%c0_8, %c0_9], %42 {strides = array<i32>} : memref<2x128xf32, #tpu.memory_space<vmem>>, vector<1x128xf32>,
    %44 = arith.mulf %40, %0 : vector<1x128xf32>
    %45 = arith.addf %36, %44 : vector<1x128xf32>
    %c1 = arith.constant 1 : index
    %c0_10 = arith.constant 0 : index
    %46 = vector.load %arg3[%c1, %c0_10] : memref<2x128xf32, #tpu.memory_space<vmem>>, vector<1x128xf32>
    tpu.vector_store %arg3[%c1, %c0_10], %45 {strides = array<i32>} : memref<2x128xf32, #tpu.memory_space<vmem>>, vector<1x128xf32>,
    return
  }
  func.func @transform_0(%arg0: i32) -> (i32, i32) {
    %c0_i32 = arith.constant 0 : i32
    %c0_i32_0 = arith.constant 0 : i32
    return %c0_i32, %arg0 : i32, i32
  }
  func.func @transform_1(%arg0: i32) -> (i32, i32) {
    %c0_i32 = arith.constant 0 : i32
    %c0_i32_0 = arith.constant 0 : i32
    %c0_i32_1 = arith.constant 0 : i32
    return %c0_i32, %c0_i32_0 : i32, i32
  }
  func.func @transform_2(%arg0: i32) -> (i32, i32) {
    %c0_i32 = arith.constant 0 : i32
    %c0_i32_0 = arith.constant 0 : i32
    return %c0_i32, %arg0 : i32, i32
  }
}

</mosaic_0001>

<llo_original>
// kernel: tpu_custom_call.1
$region0: #{tpu_custom_call.1}
  #allocation0 [shape = 'u32[]', space=smem, size = 0x4, offset = 0x4, fixed_abs, tag = 'smem constant byte address 0x4 - core index']
  #allocation1 [shape = 'u32[144,128]{1,0:T(1,128)}', space=vmem, size = 0x12000, scoped, tag = 'internal scratch']
  %s0 = inlined_call_operand.vmem [shape: f32[1,256], index: 0, kind: input, shape index: {}]
  %s1 = inlined_call_operand.vmem [shape: f32[64,8], index: 1, kind: input, shape index: {}]
  %s2 = inlined_call_operand.hbm [shape: f32[2,256], index: 2, kind: output, shape index: {}]
  %s3 = sld [smem:[#allocation0]]
  $region41: #{tpu_custom_call.1} parent=0
    _
  %s5 = ssub.s32 1, %s3
  %s6 = scalar_select 0, %s5, %s3
  $region1: #{tpu_custom_call.1} parent=0
    #allocation2 [shape = 'u8[2048]{0}', space=vmem, size = 0x800, scoped, tag = 'output window, operand 0']
    #allocation3 [shape = 's32[2]{0}', space=sflag, size = 0x8, scoped, tag = 'scoped memory for tpu_custom_call.1']
    %7 = vsyncpa [#allocation3], 0
    %s8 = scalar_lea.sflag [#allocation3], 1
    %9 = vsyncpa %s8, 0
    loop: start=0, step=1, limit=4
    $region2: #{tpu_custom_call.1} parent=1 // loop_pre_header
      _
    $region3: #{tpu_custom_call.1} parent=1 // loop_header
      %s11 = sphi 0, %s15
      %p12 = scmp.ge.s32.totalorder %s11, 4
      %s21 = sphi 0, %s23
      %s24 = sphi 0, %s21
      %s25 = sphi 0, %s24
      %s41 = sphi 0, %s25
      %s45 = sphi 0, %s45
      %s47 = sphi 0, %s45
      %s48 = sphi 0, %s47
      %s62 = sphi 0, %s48
      %s68 = sphi 0, %s70
      %s71 = sphi 0, %s68
      %s72 = sphi 0, %s71
      %s88 = sphi 0, %s72
    $region4: #{tpu_custom_call.1} parent=1 // loop_header_branch
      %14 = sbr.rel (%p12) target = $region8
    $region5: #{tpu_custom_call.1} parent=1 // loop_body
      %s16 = ssub.s32 %s11, 1
      %s17 = ssub.s32 %s11, 2
      %s18 = sadd.s32 %s11, 1
      %s19 = ssub.s32 %s11, %s18
      %p20 = scmp.eq.s32.totalorder %s19, 0
      %s22 = sadd.s32 %s21, 1
      %s23 = scalar_select %p20, %s21, %s22
      %p26 = pneg %p20
      %p27 = scmp.eq.s32.totalorder %s11, 1
      %p28 = por %p26, %p27
      %p29 = scmp.ne.s32.totalorder %s21, %s24
      %p30 = scmp.eq.s32.totalorder %s11, 0
      %p31 = por %p29, %p30
      %p32 = scmp.ne.s32.totalorder %s21, %s24
      %p33 = scmp.eq.s32.totalorder %s16, 1
      %p34 = por %p32, %p33
      %p35 = scmp.ne.s32.totalorder %s24, %s25
      %p36 = scmp.eq.s32.totalorder %s16, 0
      %p37 = por %p35, %p36
      %p38 = scmp.ne.s32.totalorder %s24, %s25
      %p39 = scmp.eq.s32.totalorder %s17, 1
      %p40 = por %p38, %p39
      %p42 = scmp.ne.s32.totalorder %s25, %s41
      %p43 = scmp.eq.s32.totalorder %s17, 0
      %p44 = por %p42, %p43
      %s46 = sadd.s32 %s45, 1
      %p49 = scmp.eq.s32.totalorder %s11, 1
      %p50 = scmp.ne.s32.totalorder %s45, %s47
      %p51 = scmp.eq.s32.totalorder %s11, 0
      %p52 = por %p50, %p51
      %p53 = scmp.ne.s32.totalorder %s45, %s47
      %p54 = scmp.eq.s32.totalorder %s16, 1
      %p55 = por %p53, %p54
      %p56 = scmp.ne.s32.totalorder %s47, %s48
      %p57 = scmp.eq.s32.totalorder %s16, 0
      %p58 = por %p56, %p57
      %p59 = scmp.ne.s32.totalorder %s47, %s48
      %p60 = scmp.eq.s32.totalorder %s17, 1
      %p61 = por %p59, %p60
      %p63 = scmp.ne.s32.totalorder %s48, %s62
      %p64 = scmp.eq.s32.totalorder %s17, 0
      %p65 = por %p63, %p64
      %s66 = ssub.s32 %s11, %s18
      %p67 = scmp.eq.s32.totalorder %s66, 0
      %s69 = sadd.s32 %s68, 1
      %s70 = scalar_select %p67, %s68, %s69
      %p73 = pneg %p67
      %p74 = scmp.eq.s32.totalorder %s11, 1
      %p75 = por %p73, %p74
      %p76 = scmp.ne.s32.totalorder %s68, %s71
      %p77 = scmp.eq.s32.totalorder %s11, 0
      %p78 = por %p76, %p77
      %p79 = scmp.ne.s32.totalorder %s68, %s71
      %p80 = scmp.eq.s32.totalorder %s16, 1
      %p81 = por %p79, %p80
      %p82 = scmp.ne.s32.totalorder %s71, %s72
      %p83 = scmp.eq.s32.totalorder %s16, 0
      %p84 = por %p82, %p83
      %p85 = scmp.ne.s32.totalorder %s71, %s72
      %p86 = scmp.eq.s32.totalorder %s17, 1
      %p87 = por %p85, %p86
      %p89 = scmp.ne.s32.totalorder %s72, %s88
      %p90 = scmp.eq.s32.totalorder %s17, 0
      %p91 = por %p89, %p90
      %p92 = scmp.le.s32.totalorder 1, %s11
      %p93 = scmp.lt.s32.totalorder %s11, 3
      %p94 = pnand %p92, %p93
      %p95 = pneg %p94
      // Predicated region
      $region9: #{tpu_custom_call.1} parent=5 // pred_check
        _
      $region10: #{tpu_custom_call.1} parent=5 // pred_check_branch
        %97 = sbr.rel (%p94) target = $region12
      $region11: #{tpu_custom_call.1} parent=5 // pred_region
        %s98 = ssub.s32 %s11, 1
        // Predicated region
        $region13: #{tpu_custom_call.1} parent=11 // pred_check
          %p99 = pneg %p58
        $region14: #{tpu_custom_call.1} parent=11 // pred_check_branch
          %101 = sbr.rel (%p99) target = $region16
        $region15: #{tpu_custom_call.1} parent=11 // pred_region
          _
        $region16: #{tpu_custom_call.1} parent=11 // pred_fallthru
          _
      $region12: #{tpu_custom_call.1} parent=5 // pred_fallthru
        _
      %p102 = scmp.lt.s32.totalorder %s11, 2
      // Predicated region
      $region17: #{tpu_custom_call.1} parent=5 // pred_check
        %p103 = pneg %p102
      $region18: #{tpu_custom_call.1} parent=5 // pred_check_branch
        %105 = sbr.rel (%p103) target = $region20
      $region19: #{tpu_custom_call.1} parent=5 // pred_region
        // Predicated region
        $region21: #{tpu_custom_call.1} parent=19 // pred_check
          %p106 = pneg %p31
        $region22: #{tpu_custom_call.1} parent=19 // pred_check_branch
          %108 = sbr.rel (%p106) target = $region24
        $region23: #{tpu_custom_call.1} parent=19 // pred_region
          %p109 = scmp.lt.s32.totalorder %s11, 1
          %s110 = scalar_select %p109, %s11, 1
          %s111 = scalar_lea.vmem %s0, %s110
        $region24: #{tpu_custom_call.1} parent=19 // pred_fallthru
          _
      $region20: #{tpu_custom_call.1} parent=5 // pred_fallthru
        _
      %p112 = scmp.le.s32.totalorder 1, %s11
      %p113 = scmp.lt.s32.totalorder %s11, 3
      %p114 = pnand %p112, %p113
      %p115 = pneg %p114
      // Predicated region
      $region25: #{tpu_custom_call.1} parent=5 // pred_check
        _
      $region26: #{tpu_custom_call.1} parent=5 // pred_check_branch
        %117 = sbr.rel (%p114) target = $region28
      $region27: #{tpu_custom_call.1} parent=5 // pred_region
        %s118 = ssub.s32 %s11, 1
        %p119 = scmp.lt.s32.totalorder %s16, 1
        %s120 = scalar_select %p119, %s16, 1
        %s121 = scalar_lea.vmem %s0, %s120
        %p122 = pneg %p37
        %p123 = pneg %p34
        %p124 = pneg %p58
        %p125 = pneg %p55
        %p126 = pneg %p84
        %p127 = pneg %p81
        %s128 = sand.u32 %s71, 1
        %s129 = scalar_lea.sflag [#allocation3], %s128
        %s130 = sand.u32 %s71, 1
        %s131 = smul.addr %s130, 2
        %s132 = scalar_lea.vmem [#allocation2], %s131
        %p133 = scmp.lt.s32.totalorder %s16, 1
        %s134 = scalar_select %p133, %s16, 1
        %s135 = scalar_lea.vmem %s0, %s134
        %v136 = vld [vmem:[%s135] sm:$0x1]
        %v137 = vld [vmem:[%s1] sm:$0xff]
        %v138 = vld [vmem:[%s1 + $0x8] sm:$0xff]
        %v139 = vld [vmem:[%s1 + $0x10] sm:$0xff]
        %v140 = vld [vmem:[%s1 + $0x18] sm:$0xff]
        %v141 = vld [vmem:[%s1 + $0x20] sm:$0xff]
        %v142 = vld [vmem:[%s1 + $0x28] sm:$0xff]
        %v143 = vld [vmem:[%s1 + $0x30] sm:$0xff]
        %v144 = vld [vmem:[%s1 + $0x38] sm:$0xff]
        %146 = vset.pattern.permute.xlu0 0
        %147 = vperm.xlu0 %146, %v137
        %v148 = vpop.permute.xlu0 %147
        %151 = vset.pattern.permute.xlu0 0
        %152 = vperm.xlu0 %151, %v138
        %v153 = vpop.permute.xlu0 %152
        %156 = vset.pattern.permute.xlu0 0
        %157 = vperm.xlu0 %156, %v139
        %v158 = vpop.permute.xlu0 %157
        %161 = vset.pattern.permute.xlu0 0
        %162 = vperm.xlu0 %161, %v140
        %v163 = vpop.permute.xlu0 %162
        %166 = vset.pattern.permute.xlu0 0
        %167 = vperm.xlu0 %166, %v141
        %v168 = vpop.permute.xlu0 %167
        %171 = vset.pattern.permute.xlu0 0
        %172 = vperm.xlu0 %171, %v142
        %v173 = vpop.permute.xlu0 %172
        %176 = vset.pattern.permute.xlu0 0
        %177 = vperm.xlu0 %176, %v143
        %v178 = vpop.permute.xlu0 %177
        %181 = vset.pattern.permute.xlu0 0
        %182 = vperm.xlu0 %181, %v144
        %v183 = vpop.permute.xlu0 %182
        %v186 = vlaneseq
        %v187 = vshrl.u32 %v186, 7
        %v188 = vsub.s32 0, %v187
        %v189 = vrot.slane %v136, %v188
        %vm191 = vcmp.lt.f32.partialorder %v148, %v189
        %vm192 = vcmp.lt.f32.partialorder %v153, %v189
        %vm193 = vcmp.lt.f32.partialorder %v158, %v189
        %vm194 = vcmp.lt.f32.partialorder %v163, %v189
        %vm195 = vcmp.lt.f32.partialorder %v168, %v189
        %vm196 = vcmp.lt.f32.partialorder %v173, %v189
        %vm197 = vcmp.lt.f32.partialorder %v178, %v189
        %vm198 = vcmp.lt.f32.partialorder %v183, %v189
        %v199 = vsel %vm191, 1, 0
        %v200 = vsel %vm192, 1, 0
        %v201 = vsel %vm193, 1, 0
        %v202 = vsel %vm194, 1, 0
        %v203 = vsel %vm195, 1, 0
        %v204 = vsel %vm196, 1, 0
        %v205 = vsel %vm197, 1, 0
        %v206 = vsel %vm198, 1, 0
        %v207 = vadd.s32 %v199, %v203
        %v208 = vadd.s32 %v200, %v204
        %v209 = vadd.s32 %v201, %v205
        %v210 = vadd.s32 %v202, %v206
        %v211 = vadd.s32 %v207, %v208
        %v212 = vadd.s32 %v209, %v210
        %v213 = vadd.s32 %v211, %v212
        %v214 = vrot.slane %v213, 4
        %v215 = vadd.s32 %v213, %v214
        %v216 = vrot.slane %v215, 2
        %v217 = vadd.s32 %v215, %v216
        %v218 = vrot.slane %v217, 1
        %v219 = vadd.s32 %v217, %v218
        %vm220 = vcmp.gt.s32.totalorder %v219, 1
        %v221 = vsel %vm220, %v219, 1
        %vm222 = vcmp.lt.s32.totalorder %v221, 63
        %v223 = vsel %vm222, %v221, 63
        %v224 = vsub.s32 %v223, 1
        %v225 = vlaneseq
        %v226 = vshrl.u32 %v225, 7
        %v227 = vadd.s32 %v226, 8
        %v228 = vadd.s32 %v226, 16
        %v229 = vadd.s32 %v226, 24
        %v230 = vadd.s32 %v226, 32
        %v231 = vadd.s32 %v226, 40
        %v232 = vadd.s32 %v226, 48
        %v233 = vadd.s32 %v226, 56
        %vm234 = vcmp.eq.s32.totalorder %v226, %v224
        %vm235 = vcmp.eq.s32.totalorder %v227, %v224
        %vm236 = vcmp.eq.s32.totalorder %v228, %v224
        %vm237 = vcmp.eq.s32.totalorder %v229, %v224
        %vm238 = vcmp.eq.s32.totalorder %v230, %v224
        %vm239 = vcmp.eq.s32.totalorder %v231, %v224
        %vm240 = vcmp.eq.s32.totalorder %v232, %v224
        %vm241 = vcmp.eq.s32.totalorder %v233, %v224
        %v242 = vsel %vm234, 1, 0
        %v243 = vsel %vm235, 1, 0
        %v244 = vsel %vm236, 1, 0
        %v245 = vsel %vm237, 1, 0
        %v246 = vsel %vm238, 1, 0
        %v247 = vsel %vm239, 1, 0
        %v248 = vsel %vm240, 1, 0
        %v249 = vsel %vm241, 1, 0
        %v250 = vcvt.s32.f32 %v242
        %v251 = vcvt.s32.f32 %v243
        %v252 = vcvt.s32.f32 %v244
        %v253 = vcvt.s32.f32 %v245
        %v254 = vcvt.s32.f32 %v246
        %v255 = vcvt.s32.f32 %v247
        %v256 = vcvt.s32.f32 %v248
        %v257 = vcvt.s32.f32 %v249
        %258 = vset.pattern.permute.xlu0 1
        %259 = vperm.xlu0 %258, %v137
        %v260 = vpop.permute.xlu0 %259
        %262 = vset.pattern.permute.xlu0 1
        %263 = vperm.xlu0 %262, %v138
        %v264 = vpop.permute.xlu0 %263
        %266 = vset.pattern.permute.xlu0 1
        %267 = vperm.xlu0 %266, %v139
        %v268 = vpop.permute.xlu0 %267
        %270 = vset.pattern.permute.xlu0 1
        %271 = vperm.xlu0 %270, %v140
        %v272 = vpop.permute.xlu0 %271
        %274 = vset.pattern.permute.xlu0 1
        %275 = vperm.xlu0 %274, %v141
        %v276 = vpop.permute.xlu0 %275
        %278 = vset.pattern.permute.xlu0 1
        %279 = vperm.xlu0 %278, %v142
        %v280 = vpop.permute.xlu0 %279
        %282 = vset.pattern.permute.xlu0 1
        %283 = vperm.xlu0 %282, %v143
        %v284 = vpop.permute.xlu0 %283
        %286 = vset.pattern.permute.xlu0 1
        %287 = vperm.xlu0 %286, %v144
        %v288 = vpop.permute.xlu0 %287
        %v290 = vmul.f32 %v250, %v260
        %v291 = vmul.f32 %v251, %v264
        %v292 = vmul.f32 %v252, %v268
        %v293 = vmul.f32 %v253, %v272
        %v294 = vmul.f32 %v254, %v276
        %v295 = vmul.f32 %v255, %v280
        %v296 = vmul.f32 %v256, %v284
        %v297 = vmul.f32 %v257, %v288
        %v298 = vadd.f32 %v290, %v291
        %v299 = vadd.f32 %v298, %v292
        %v300 = vadd.f32 %v299, %v293
        %v301 = vadd.f32 %v300, %v294
        %v302 = vadd.f32 %v301, %v295
        %v303 = vadd.f32 %v302, %v296
        %v304 = vadd.f32 %v303, %v297
        %v305 = vrot.slane %v304, 4
        %v306 = vadd.f32 %v304, %v305
        %v307 = vrot.slane %v306, 2
        %v308 = vadd.f32 %v306, %v307
        %v309 = vrot.slane %v308, 1
        %v310 = vadd.f32 %v308, %v309
        %311 = vset.pattern.permute.xlu0 2
        %312 = vperm.xlu0 %311, %v137
        %v313 = vpop.permute.xlu0 %312
        %315 = vset.pattern.permute.xlu0 2
        %316 = vperm.xlu0 %315, %v138
        %v317 = vpop.permute.xlu0 %316
        %319 = vset.pattern.permute.xlu0 2
        %320 = vperm.xlu0 %319, %v139
        %v321 = vpop.permute.xlu0 %320
        %323 = vset.pattern.permute.xlu0 2
        %324 = vperm.xlu0 %323, %v140
        %v325 = vpop.permute.xlu0 %324
        %327 = vset.pattern.permute.xlu0 2
        %328 = vperm.xlu0 %327, %v141
        %v329 = vpop.permute.xlu0 %328
        %331 = vset.pattern.permute.xlu0 2
        %332 = vperm.xlu0 %331, %v142
        %v333 = vpop.permute.xlu0 %332
        %335 = vset.pattern.permute.xlu0 2
        %336 = vperm.xlu0 %335, %v143
        %v337 = vpop.permute.xlu0 %336
        %339 = vset.pattern.permute.xlu0 2
        %340 = vperm.xlu0 %339, %v144
        %v341 = vpop.permute.xlu0 %340
        %v343 = vmul.f32 %v250, %v313
        %v344 = vmul.f32 %v251, %v317
        %v345 = vmul.f32 %v252, %v321
        %v346 = vmul.f32 %v253, %v325
        %v347 = vmul.f32 %v254, %v329
        %v348 = vmul.f32 %v255, %v333
        %v349 = vmul.f32 %v256, %v337
        %v350 = vmul.f32 %v257, %v341
        %v351 = vadd.f32 %v343, %v344
        %v352 = vadd.f32 %v351, %v345
        %v353 = vadd.f32 %v352, %v346
        %v354 = vadd.f32 %v353, %v347
        %v355 = vadd.f32 %v354, %v348
        %v356 = vadd.f32 %v355, %v349
        %v357 = vadd.f32 %v356, %v350
        %v358 = vrot.slane %v357, 4
        %v359 = vadd.f32 %v357, %v358
        %v360 = vrot.slane %v359, 2
        %v361 = vadd.f32 %v359, %v360
        %v362 = vrot.slane %v361, 1
        %v363 = vadd.f32 %v361, %v362
        %364 = vset.pattern.permute.xlu0 3
        %365 = vperm.xlu0 %364, %v137
        %v366 = vpop.permute.xlu0 %365
        %368 = vset.pattern.permute.xlu0 3
        %369 = vperm.xlu0 %368, %v138
        %v370 = vpop.permute.xlu0 %369
        %372 = vset.pattern.permute.xlu0 3
        %373 = vperm.xlu0 %372, %v139
        %v374 = vpop.permute.xlu0 %373
        %376 = vset.pattern.permute.xlu0 3
        %377 = vperm.xlu0 %376, %v140
        %v378 = vpop.permute.xlu0 %377
        %380 = vset.pattern.permute.xlu0 3
        %381 = vperm.xlu0 %380, %v141
        %v382 = vpop.permute.xlu0 %381
        %384 = vset.pattern.permute.xlu0 3
        %385 = vperm.xlu0 %384, %v142
        %v386 = vpop.permute.xlu0 %385
        %388 = vset.pattern.permute.xlu0 3
        %389 = vperm.xlu0 %388, %v143
        %v390 = vpop.permute.xlu0 %389
        %392 = vset.pattern.permute.xlu0 3
        %393 = vperm.xlu0 %392, %v144
        %v394 = vpop.permute.xlu0 %393
        %v396 = vmul.f32 %v250, %v366
        %v397 = vmul.f32 %v251, %v370
        %v398 = vmul.f32 %v252, %v374
        %v399 = vmul.f32 %v253, %v378
        %v400 = vmul.f32 %v254, %v382
        %v401 = vmul.f32 %v255, %v386
        %v402 = vmul.f32 %v256, %v390
        %v403 = vmul.f32 %v257, %v394
        %v404 = vadd.f32 %v396, %v397
        %v405 = vadd.f32 %v404, %v398
        %v406 = vadd.f32 %v405, %v399
        %v407 = vadd.f32 %v406, %v400
        %v408 = vadd.f32 %v407, %v401
        %v409 = vadd.f32 %v408, %v402
        %v410 = vadd.f32 %v409, %v403
        %v411 = vrot.slane %v410, 4
        %v412 = vadd.f32 %v410, %v411
        %v413 = vrot.slane %v412, 2
        %v414 = vadd.f32 %v412, %v413
        %v415 = vrot.slane %v414, 1
        %v416 = vadd.f32 %v414, %v415
        %417 = vset.pattern.permute.xlu0 4
        %418 = vperm.xlu0 %417, %v137
        %v419 = vpop.permute.xlu0 %418
        %421 = vset.pattern.permute.xlu0 4
        %422 = vperm.xlu0 %421, %v138
        %v423 = vpop.permute.xlu0 %422
        %425 = vset.pattern.permute.xlu0 4
        %426 = vperm.xlu0 %425, %v139
        %v427 = vpop.permute.xlu0 %426
        %429 = vset.pattern.permute.xlu0 4
        %430 = vperm.xlu0 %429, %v140
        %v431 = vpop.permute.xlu0 %430
        %433 = vset.pattern.permute.xlu0 4
        %434 = vperm.xlu0 %433, %v141
        %v435 = vpop.permute.xlu0 %434
        %437 = vset.pattern.permute.xlu0 4
        %438 = vperm.xlu0 %437, %v142
        %v439 = vpop.permute.xlu0 %438
        %441 = vset.pattern.permute.xlu0 4
        %442 = vperm.xlu0 %441, %v143
        %v443 = vpop.permute.xlu0 %442
        %445 = vset.pattern.permute.xlu0 4
        %446 = vperm.xlu0 %445, %v144
        %v447 = vpop.permute.xlu0 %446
        %v449 = vmul.f32 %v250, %v419
        %v450 = vmul.f32 %v251, %v423
        %v451 = vmul.f32 %v252, %v427
        %v452 = vmul.f32 %v253, %v431
        %v453 = vmul.f32 %v254, %v435
        %v454 = vmul.f32 %v255, %v439
        %v455 = vmul.f32 %v256, %v443
        %v456 = vmul.f32 %v257, %v447
        %v457 = vadd.f32 %v449, %v450
        %v458 = vadd.f32 %v457, %v451
        %v459 = vadd.f32 %v458, %v452
        %v460 = vadd.f32 %v459, %v453
        %v461 = vadd.f32 %v460, %v454
        %v462 = vadd.f32 %v461, %v455
        %v463 = vadd.f32 %v462, %v456
        %v464 = vrot.slane %v463, 4
        %v465 = vadd.f32 %v463, %v464
        %v466 = vrot.slane %v465, 2
        %v467 = vadd.f32 %v465, %v466
        %v468 = vrot.slane %v467, 1
        %v469 = vadd.f32 %v467, %v468
        %v470 = vmul.f32 %v363, %v136
        %v471 = vadd.f32 %v310, %v470
        %472 = vst [vmem:[%s132] sm:$0x1] %v471
        %v473 = vmul.f32 %v469, %v136
        %v474 = vadd.f32 %v416, %v473
        %475 = vst [vmem:[%s132 + $0x1] sm:$0x1] %v474
        %s476 = sand.u32 %s71, 1
        %s477 = scalar_lea.sflag [#allocation3], %s476
        %s478 = sand.u32 %s71, 1
        %s479 = smul.addr %s478, 2
        %s480 = scalar_lea.vmem [#allocation2], %s479
        // Predicated region
        $region29: #{tpu_custom_call.1} parent=27 // pred_check
          %p481 = pneg %p81
        $region30: #{tpu_custom_call.1} parent=27 // pred_check_branch
          %483 = sbr.rel (%p481) target = $region32
        $region31: #{tpu_custom_call.1} parent=27 // pred_region
          %s485 = ssub.s32 32, 32
          %486 = vsyncadd %s477, %s485
          %s487 = smul.addr %s16, 32
          %s488 = scalar_lea.hbm %s2, %s487
          %s490 = sshll.u32 %s480, 4
          %s491 = int_to_ptr.vmem [resolvable:$true] %s490
          %493 = dma.vmem_to_hbm [thread:$0]  %s491, 32, %s488, %s477
        $region32: #{tpu_custom_call.1} parent=27 // pred_fallthru
          _
      $region28: #{tpu_custom_call.1} parent=5 // pred_fallthru
        _
      %p494 = scmp.le.s32.totalorder 2, %s11
      // Predicated region
      $region33: #{tpu_custom_call.1} parent=5 // pred_check
        %p495 = pneg %p494
      $region34: #{tpu_custom_call.1} parent=5 // pred_check_branch
        %497 = sbr.rel (%p495) target = $region36
      $region35: #{tpu_custom_call.1} parent=5 // pred_region
        %s498 = ssub.s32 %s11, 2
        // Predicated region
        $region37: #{tpu_custom_call.1} parent=35 // pred_check
          %p499 = pneg %p87
        $region38: #{tpu_custom_call.1} parent=35 // pred_check_branch
          %501 = sbr.rel (%p499) target = $region40
        $region39: #{tpu_custom_call.1} parent=35 // pred_region
          %s502 = sand.u32 %s72, 1
          %s503 = scalar_lea.sflag [#allocation3], %s502
          %s504 = sand.u32 %s72, 1
          %s505 = smul.addr %s504, 2
          %s506 = scalar_lea.vmem [#allocation2], %s505
          %507 = dma.done %s503, 32
        $region40: #{tpu_custom_call.1} parent=35 // pred_fallthru
          _
      $region36: #{tpu_custom_call.1} parent=5 // pred_fallthru
        _
    $region6: #{tpu_custom_call.1} parent=1 // loop_footer
      %s15 = sadd.s32 1, %s11
    $region7: #{tpu_custom_call.1} parent=1 // loop_footer_branch
      %10 = sbr.rel target = $region3
    $region8: #{tpu_custom_call.1} parent=1 // loop_exit
      _
    %508 = vsyncpa [#allocation3], 1
    %s509 = scalar_lea.sflag [#allocation3], 1
    %510 = vsyncpa %s509, 1

</llo_original>
